<compile_context>
chip_gen: v7x
topology: tpu7x:2x2x1
jax: 0.10.0
libtpu: 0.0.40
codegen_flags: <defaults>
</compile_context>

<pallas_src>
import functools

import jax
import jax.numpy as jnp
from jax.experimental import pallas as pl
from jax.experimental.pallas import tpu as pltpu


def _expert_ffn_kernel(x_ref, w1_ref, b1_ref, w2_ref, b2_ref, o_ref, acc_ref):
    """Grid = (expert e, token tile n, d_ff tile h); h is the reduction axis."""
    h_idx = pl.program_id(2)
    n_h = pl.num_programs(2)

    b, tn, m = x_ref.shape
    # Merge (batch, token-tile) -> rows. Free when tn is a multiple of the
    # sublane tile (8 f32 / 16 bf16); otherwise a cheap VMEM copy.
    x = x_ref[...].reshape(b * tn, m)                       # (rows, M)

    @pl.when(h_idx == 0)
    def _init():
        # Seed the accumulator with the second-layer bias.
        acc_ref[...] = jnp.broadcast_to(
            b2_ref[...].astype(jnp.float32), acc_ref.shape)

    # First matmul tile: (rows, M) @ (M, th) -> f32, + b1 tile, GELU in f32.
    hidden = jnp.dot(x, w1_ref[...], preferred_element_type=jnp.float32)
    hidden = hidden + b1_ref[...].astype(jnp.float32)       # (1, th) broadcast
    hidden = jax.nn.gelu(hidden, approximate=True)

    # Second matmul tile: accumulate (rows, th) @ (th, M) into f32 scratch.
    acc_ref[...] += jnp.dot(hidden.astype(w2_ref.dtype), w2_ref[...],
                            preferred_element_type=jnp.float32)

    @pl.when(h_idx == n_h - 1)
    def _finalize():
        o_ref[...] = acc_ref[...].reshape(b, tn, m).astype(o_ref.dtype)


@functools.partial(jax.jit, static_argnames=("num_local_experts", "tn", "th"))
def experts_forward(inputs, w1, b1, w2, b2, *, num_local_experts, tn=None, th=None):
    """inputs: (B, E*T, M); w1: (E, M, H); b1: (E, 1, H); w2: (E, H, M); b2: (E, 1, M).

    tn: token-tile size per grid step (multiple of 8/16 recommended; must divide T).
    th: d_ff tile size (multiple of 128 recommended; must divide H).
    """
    B, ET, M = inputs.shape
    E = num_local_experts
    assert ET % E == 0, "token axis must divide evenly across local experts"
    T = ET // E
    H = w1.shape[-1]

    tn = T if tn is None else tn
    th = H if th is None else th
    assert T % tn == 0, (T, tn)
    assert H % th == 0, (H, th)

    n_tiles = T // tn
    h_tiles = H // th

    out = pl.pallas_call(
        _expert_ffn_kernel,
        out_shape=jax.ShapeDtypeStruct((B, ET, M), inputs.dtype),
        grid_spec=pltpu.PrefetchScalarGridSpec(
            num_scalar_prefetch=0,
            grid=(E, n_tiles, h_tiles),
            in_specs=[
                # Activations: indexed straight out of (B, E*T, M); no wrapper
                # transpose. Block index along tokens = e*n_tiles + n.
                pl.BlockSpec((B, tn, M), lambda e, n, h: (0, e * n_tiles + n, 0)),
                # Per-expert weight / bias tiles (leading expert dim squeezed).
                pl.BlockSpec((None, M, th), lambda e, n, h: (e, 0, h)),
                pl.BlockSpec((None, 1, th), lambda e, n, h: (e, 0, h)),
                pl.BlockSpec((None, th, M), lambda e, n, h: (e, h, 0)),
                pl.BlockSpec((None, 1, M), lambda e, n, h: (e, 0, 0)),
            ],
            out_specs=pl.BlockSpec(
                (B, tn, M), lambda e, n, h: (0, e * n_tiles + n, 0)),
            scratch_shapes=[pltpu.VMEM((B * tn, M), jnp.float32)],
        ),
        compiler_params=pltpu.CompilerParams(
            # e, n index disjoint output blocks -> megacore-parallel on v7x;
            # h is the accumulated reduction axis.
            dimension_semantics=("parallel", "parallel", "arbitrary"),
            # Raise the default scoped-VMEM limit (16/32 MiB) but stay within
            # v7x's 64 MiB physical VMEM per TensorCore.
            vmem_limit_bytes=64 * 1024 * 1024,
        ),
    )(inputs, w1, b1, w2, b2)

    return out


def _reference(inputs, w1, b1, w2, b2, num_local_experts):
    """Pure-JAX reference mirroring the kernel's mixed-precision math."""
    B, ET, M = inputs.shape
    E = num_local_experts
    T = ET // E
    outs = []
    for e in range(E):
        chunk = inputs[:, e * T:(e + 1) * T, :]                       # (B, T, M)
        h = jnp.einsum("btm,mh->bth", chunk, w1[e],
                       preferred_element_type=jnp.float32)
        h = h + b1[e][0].astype(jnp.float32)
        h = jax.nn.gelu(h, approximate=True)
        y = jnp.einsum("bth,hm->btm", h.astype(w2.dtype), w2[e],
                       preferred_element_type=jnp.float32)
        y = y + b2[e][0].astype(jnp.float32)
        outs.append(y.astype(inputs.dtype))
    return jnp.concatenate(outs, axis=1).astype(jnp.float32)


if __name__ == "__main__":
    key = jax.random.PRNGKey(0)
    # batch, local experts, tokens per expert, d_model, d_ff
    B, E, T, M, H = 2, 2, 32, 128, 256
    TN, TH = 16, 128          # exercises all three grid axes: (2, 2, 2)
    dtype = jnp.bfloat16      # bf16 matmuls with f32 MXU accumulation

    k_x, k_w1, k_b1, k_w2, k_b2 = jax.random.split(key, 5)
    x = jax.random.normal(k_x, (B, E * T, M), jnp.float32).astype(dtype)
    w1 = (jax.random.normal(k_w1, (E, M, H), jnp.float32) * 0.05).astype(dtype)
    b1 = (jax.random.normal(k_b1, (E, 1, H), jnp.float32) * 0.01).astype(dtype)
    w2 = (jax.random.normal(k_w2, (E, H, M), jnp.float32) * 0.05).astype(dtype)
    b2 = (jax.random.normal(k_b2, (E, 1, M), jnp.float32) * 0.01).astype(dtype)

    out = experts_forward(x, w1, b1, w2, b2, num_local_experts=E, tn=TN, th=TH)
    out = jax.block_until_ready(out)

    ref = _reference(x, w1, b1, w2, b2, E)
    assert out.shape == (B, E * T, M), out.shape
    err = float(jnp.max(jnp.abs(out.astype(jnp.float32) - ref)))
    assert err < 2e-2, err

    print("KERNEL_OK")
</pallas_src>

<mosaic_0001>
module attributes {stable_mosaic.version = 11 : i64} {
  func.func @_expert_ffn_kernel(%arg0: i32, %arg1: i32, %arg2: i32, %arg3: memref<2x16x128xbf16, #tpu.memory_space<vmem>>, %arg4: memref<1x128x128xbf16, #tpu.memory_space<vmem>>, %arg5: memref<1x1x128xbf16, #tpu.memory_space<vmem>>, %arg6: memref<1x128x128xbf16, #tpu.memory_space<vmem>>, %arg7: memref<1x1x128xbf16, #tpu.memory_space<vmem>>, %arg8: memref<2x16x128xbf16, #tpu.memory_space<vmem>>, %arg9: memref<32x128xf32, #tpu.memory_space<vmem>>) attributes {dimension_semantics = [#tpu.dimension_semantics<parallel>, #tpu.dimension_semantics<parallel>, #tpu.dimension_semantics<arbitrary>], iteration_bounds = array<i64: 2, 2, 2>, scalar_prefetch = 0 : i64, scratch_operands = 1 : i64, tpu.core_type = #tpu.core_type<tc>, window_params = [{transform_indices = @transform_0, window_bounds = array<i64: 2, 16, 128>}, {transform_indices = @transform_1, window_bounds = array<i64: 1, 128, 128>}, {transform_indices = @transform_2, window_bounds = array<i64: 1, 1, 128>}, {transform_indices = @transform_3, window_bounds = array<i64: 1, 128, 128>}, {transform_indices = @transform_4, window_bounds = array<i64: 1, 1, 128>}, {transform_indices = @transform_5, window_bounds = array<i64: 2, 16, 128>}]} {
    %c0 = arith.constant 0 : index
    %c0_0 = arith.constant 0 : index
    %c0_1 = arith.constant 0 : index
    %0 = vector.load %arg3[%c0, %c0_0, %c0_1] : memref<2x16x128xbf16, #tpu.memory_space<vmem>>, vector<2x16x128xbf16>
    %1 = vector.shape_cast %0 : vector<2x16x128xbf16> to vector<32x128xbf16>
    %c0_i32 = arith.constant 0 : i32
    %2 = arith.cmpi eq, %arg2, %c0_i32 : i32
    %3 = arith.extui %2 : i1 to i32
    %c0_i32_2 = arith.constant 0 : i32
    %4 = arith.cmpi ne, %3, %c0_i32_2 : i32
    scf.if %4 {
      %c0_22 = arith.constant 0 : index
      %c0_23 = arith.constant 0 : index
      %c0_24 = arith.constant 0 : index
      %36 = vector.load %arg7[%c0_22, %c0_23, %c0_24] : memref<1x1x128xbf16, #tpu.memory_space<vmem>>, vector<1x1x128xbf16>
      %37 = vector.shape_cast %36 : vector<1x1x128xbf16> to vector<1x128xbf16>
      %38 = arith.extf %37 : vector<1x128xbf16> to vector<1x128xf32>
      %39 = vector.shape_cast %38 : vector<1x128xf32> to vector<1x128xf32>
      %40 = vector.broadcast %39 : vector<1x128xf32> to vector<32x128xf32>
      %c0_25 = arith.constant 0 : index
      %c0_26 = arith.constant 0 : index
      %41 = vector.load %arg9[%c0_25, %c0_26] : memref<32x128xf32, #tpu.memory_space<vmem>>, vector<32x128xf32>
      tpu.vector_store %arg9[%c0_25, %c0_26], %40 {strides = array<i32>} : memref<32x128xf32, #tpu.memory_space<vmem>>, vector<32x128xf32>,
    } else {
    }
    %c0_3 = arith.constant 0 : index
    %c0_4 = arith.constant 0 : index
    %c0_5 = arith.constant 0 : index
    %5 = vector.load %arg4[%c0_3, %c0_4, %c0_5] : memref<1x128x128xbf16, #tpu.memory_space<vmem>>, vector<1x128x128xbf16>
    %6 = vector.shape_cast %5 : vector<1x128x128xbf16> to vector<128x128xbf16>
    %cst = arith.constant dense<0.000000e+00> : vector<32x128xf32>
    %7 = tpu.matmul %1, %6, %cst {dimension_numbers = #tpu.dot_dimension_numbers<[1], [0], [0], [1], [0, 0, 1, 1], [], []>} : vector<32x128xbf16>, vector<128x128xbf16>, vector<32x128xf32> -> vector<32x128xf32>
    %c0_6 = arith.constant 0 : index
    %c0_7 = arith.constant 0 : index
    %c0_8 = arith.constant 0 : index
    %8 = vector.load %arg5[%c0_6, %c0_7, %c0_8] : memref<1x1x128xbf16, #tpu.memory_space<vmem>>, vector<1x1x128xbf16>
    %9 = vector.shape_cast %8 : vector<1x1x128xbf16> to vector<1x128xbf16>
    %10 = arith.extf %9 : vector<1x128xbf16> to vector<1x128xf32>
    %11 = vector.broadcast %10 : vector<1x128xf32> to vector<32x128xf32>
    %12 = arith.addf %7, %11 : vector<32x128xf32>
    %13 = arith.mulf %12, %12 : vector<32x128xf32>
    %14 = arith.mulf %12, %13 : vector<32x128xf32>
    %cst_9 = arith.constant 4.471500e-02 : f32
    %15 = vector.broadcast %cst_9 : f32 to vector<32x128xf32>
    %16 = arith.mulf %15, %14 : vector<32x128xf32>
    %17 = arith.addf %12, %16 : vector<32x128xf32>
    %cst_10 = arith.constant 0.797884583 : f32
    %18 = vector.broadcast %cst_10 : f32 to vector<32x128xf32>
    %19 = arith.mulf %18, %17 : vector<32x128xf32>
    %20 = math.tanh %19 : vector<32x128xf32>
    %cst_11 = arith.constant 1.000000e+00 : f32
    %21 = vector.broadcast %cst_11 : f32 to vector<32x128xf32>
    %22 = arith.addf %21, %20 : vector<32x128xf32>
    %cst_12 = arith.constant 5.000000e-01 : f32
    %23 = vector.broadcast %cst_12 : f32 to vector<32x128xf32>
    %24 = arith.mulf %23, %22 : vector<32x128xf32>
    %25 = arith.mulf %12, %24 : vector<32x128xf32>
    %c0_13 = arith.constant 0 : index
    %c0_14 = arith.constant 0 : index
    %26 = vector.load %arg9[%c0_13, %c0_14] : memref<32x128xf32, #tpu.memory_space<vmem>>, vector<32x128xf32>
    %27 = arith.truncf %25 : vector<32x128xf32> to vector<32x128xbf16>
    %c0_15 = arith.constant 0 : index
    %c0_16 = arith.constant 0 : index
    %c0_17 = arith.constant 0 : index
    %28 = vector.load %arg6[%c0_15, %c0_16, %c0_17] : memref<1x128x128xbf16, #tpu.memory_space<vmem>>, vector<1x128x128xbf16>
    %29 = vector.shape_cast %28 : vector<1x128x128xbf16> to vector<128x128xbf16>
    %cst_18 = arith.constant dense<0.000000e+00> : vector<32x128xf32>
    %30 = tpu.matmul %27, %29, %cst_18 {dimension_numbers = #tpu.dot_dimension_numbers<[1], [0], [0], [1], [0, 0, 1, 1], [], []>} : vector<32x128xbf16>, vector<128x128xbf16>, vector<32x128xf32> -> vector<32x128xf32>
    %31 = arith.addf %26, %30 : vector<32x128xf32>
    %c0_19 = arith.constant 0 : index
    %c0_20 = arith.constant 0 : index
    %32 = vector.load %arg9[%c0_19, %c0_20] : memref<32x128xf32, #tpu.memory_space<vmem>>, vector<32x128xf32>
    tpu.vector_store %arg9[%c0_19, %c0_20], %31 {strides = array<i32>} : memref<32x128xf32, #tpu.memory_space<vmem>>, vector<32x128xf32>,
    %c1_i32 = arith.constant 1 : i32
    %33 = arith.cmpi eq, %arg2, %c1_i32 : i32
    %34 = arith.extui %33 : i1 to i32
    %c0_i32_21 = arith.constant 0 : i32
    %35 = arith.cmpi ne, %34, %c0_i32_21 : i32
    scf.if %35 {
      %c0_22 = arith.constant 0 : index
      %c0_23 = arith.constant 0 : index
      %36 = vector.load %arg9[%c0_22, %c0_23] : memref<32x128xf32, #tpu.memory_space<vmem>>, vector<32x128xf32>
      %37 = vector.shape_cast %36 : vector<32x128xf32> to vector<2x16x128xf32>
      %38 = arith.truncf %37 : vector<2x16x128xf32> to vector<2x16x128xbf16>
      %c0_24 = arith.constant 0 : index
      %c0_25 = arith.constant 0 : index
      %c0_26 = arith.constant 0 : index
      %39 = vector.load %arg8[%c0_24, %c0_25, %c0_26] : memref<2x16x128xbf16, #tpu.memory_space<vmem>>, vector<2x16x128xbf16>
      tpu.vector_store %arg8[%c0_24, %c0_25, %c0_26], %38 {strides = array<i32>} : memref<2x16x128xbf16, #tpu.memory_space<vmem>>, vector<2x16x128xbf16>,
    } else {
    }
    return
  }
  func.func @transform_0(%arg0: i32, %arg1: i32, %arg2: i32) -> (i32, i32, i32) {
    %c2_i32 = arith.constant 2 : i32
    %0 = arith.muli %arg0, %c2_i32 : i32
    %1 = arith.addi %0, %arg1 : i32
    %c0_i32 = arith.constant 0 : i32
    %c0_i32_0 = arith.constant 0 : i32
    %c0_i32_1 = arith.constant 0 : i32
    return %c0_i32, %1, %c0_i32_0 : i32, i32, i32
  }
  func.func @transform_1(%arg0: i32, %arg1: i32, %arg2: i32) -> (i32, i32, i32) {
    %c0_i32 = arith.constant 0 : i32
    %c0_i32_0 = arith.constant 0 : i32
    return %arg0, %c0_i32, %arg2 : i32, i32, i32
  }
  func.func @transform_2(%arg0: i32, %arg1: i32, %arg2: i32) -> (i32, i32, i32) {
    %c0_i32 = arith.constant 0 : i32
    %c0_i32_0 = arith.constant 0 : i32
    return %arg0, %c0_i32, %arg2 : i32, i32, i32
  }
  func.func @transform_3(%arg0: i32, %arg1: i32, %arg2: i32) -> (i32, i32, i32) {
    %c0_i32 = arith.constant 0 : i32
    %c0_i32_0 = arith.constant 0 : i32
    return %arg0, %arg2, %c0_i32 : i32, i32, i32
  }
  func.func @transform_4(%arg0: i32, %arg1: i32, %arg2: i32) -> (i32, i32, i32) {
    %c0_i32 = arith.constant 0 : i32
    %c0_i32_0 = arith.constant 0 : i32
    %c0_i32_1 = arith.constant 0 : i32
    return %arg0, %c0_i32, %c0_i32_0 : i32, i32, i32
  }
  func.func @transform_5(%arg0: i32, %arg1: i32, %arg2: i32) -> (i32, i32, i32) {
    %c2_i32 = arith.constant 2 : i32
    %0 = arith.muli %arg0, %c2_i32 : i32
    %1 = arith.addi %0, %arg1 : i32
    %c0_i32 = arith.constant 0 : i32
    %c0_i32_0 = arith.constant 0 : i32
    %c0_i32_1 = arith.constant 0 : i32
    return %c0_i32, %1, %c0_i32_0 : i32, i32, i32
  }
}

</mosaic_0001>

<llo_original>
// kernel: experts_forward.1
$region0: #{experts_forward.1}
  #allocation0 [shape = 'u32[]', space=smem, size = 0x4, offset = 0x4, fixed_abs, tag = 'smem constant byte address 0x4 - core index']
  #allocation1 [shape = 'u32[144,128]{1,0:T(1,128)}', space=vmem, size = 0x12000, scoped, tag = 'internal scratch']
  #allocation2 [shape = 'f32[32,128]{1,0:T(8,128)}', space=vmem, size = 0x4000, scoped, tag = 'scratch operand']
  #allocation13 [shape = 's32[]', space=sflag, size = 0x4, offset = 0, fixed_abs, tag = 'sflag constant byte address 0x0 - dummy sync flag']
  #allocation15 [shape = 's32[]', space=sflag, size = 0x4, offset = 0, fixed_abs, tag = 'sflag constant byte address 0x0 - dummy sync flag']
  %s0 = inlined_call_operand.hbm [shape: bf16[2,64,128], index: 0, kind: input, shape index: {}]
  %s1 = inlined_call_operand.hbm [shape: bf16[2,128,256], index: 1, kind: input, shape index: {}]
  %s2 = inlined_call_operand.hbm [shape: bf16[2,1,256], index: 2, kind: input, shape index: {}]
  %s3 = inlined_call_operand.hbm [shape: bf16[2,256,128], index: 3, kind: input, shape index: {}]
  %s4 = inlined_call_operand.hbm [shape: bf16[2,1,128], index: 4, kind: input, shape index: {}]
  %s5 = inlined_call_operand.hbm [shape: bf16[2,64,128], index: 5, kind: output, shape index: {}]
  %s6 = sld [smem:[#allocation0]]
  $region81: #{experts_forward.1} parent=0
    _
  %s8 = ssub.s32 1, %s6
  %s9 = scalar_select 0, %s8, %s6
  $region1: #{experts_forward.1} parent=0
    #allocation3 [shape = 'u8[16384]{0}', space=vmem, size = 0x4000, scoped, tag = 'input window, operand 0']
    #allocation4 [shape = 's32[2]{0}', space=sflag, size = 0x8, scoped, tag = 'scoped memory for experts_forward.1']
    #allocation5 [shape = 's32[2]{0}', space=sflag, size = 0x8, scoped, tag = 'scoped memory for experts_forward.1']
    #allocation6 [shape = 'u8[65536]{0}', space=vmem, size = 0x10000, scoped, tag = 'input window, operand 1']
    #allocation7 [shape = 's32[2]{0}', space=sflag, size = 0x8, scoped, tag = 'scoped memory for experts_forward.1']
    #allocation8 [shape = 'u8[1024]{0}', space=vmem, size = 0x400, scoped, tag = 'input window, operand 2']
    #allocation9 [shape = 'u8[65536]{0}', space=vmem, size = 0x10000, scoped, tag = 'input window, operand 3']
    #allocation10 [shape = 's32[2]{0}', space=sflag, size = 0x8, scoped, tag = 'scoped memory for experts_forward.1']
    #allocation11 [shape = 'u8[1024]{0}', space=vmem, size = 0x400, scoped, tag = 'input window, operand 4']
    #allocation12 [shape = 'u8[16384]{0}', space=vmem, size = 0x4000, scoped, tag = 'output window, operand 0']
    %10 = vsyncpa [#allocation4], 0
    %s11 = scalar_lea.sflag [#allocation4], 1
    %12 = vsyncpa %s11, 0
    %13 = vsyncpa [#allocation7], 0
    %s14 = scalar_lea.sflag [#allocation7], 1
    %15 = vsyncpa %s14, 0
    %16 = vsyncpa [#allocation10], 0
    %s17 = scalar_lea.sflag [#allocation10], 1
    %18 = vsyncpa %s17, 0
    %19 = vsyncpa [#allocation5], 0
    %s20 = scalar_lea.sflag [#allocation5], 1
    %21 = vsyncpa %s20, 0
    loop: start=0, step=1, limit=10
    $region2: #{experts_forward.1} parent=1 // loop_pre_header
      _
    $region3: #{experts_forward.1} parent=1 // loop_header
      %s23 = sphi 0, %s27
      %p24 = scmp.ge.s32.totalorder %s23, 10
      %s30 = sphi 0, %s49
      %s31 = sphi 0, %s45
      %s32 = sphi 0, %s41
      %s33 = sphi 0, %s30
      %s34 = sphi 0, %s31
      %s35 = sphi 0, %s32
      %s36 = sphi 0, %s33
      %s37 = sphi 0, %s34
      %s38 = sphi 0, %s35
      %s56 = sphi 0, %s58
      %s59 = sphi 0, %s56
      %s60 = sphi 0, %s59
      %s76 = sphi 0, %s60
      %s84 = sphi 0, %s86
      %s87 = sphi 0, %s84
      %s88 = sphi 0, %s87
      %s104 = sphi 0, %s88
      %s112 = sphi 0, %s114
      %s115 = sphi 0, %s112
      %s116 = sphi 0, %s115
      %s132 = sphi 0, %s116
      %s140 = sphi 0, %s142
      %s143 = sphi 0, %s140
      %s144 = sphi 0, %s143
      %s160 = sphi 0, %s144
      %s166 = sphi 0, %s168
      %s169 = sphi 0, %s166
      %s170 = sphi 0, %s169
      %s186 = sphi 0, %s170
      %s196 = sphi 0, %s198
      %s199 = sphi 0, %s196
      %s200 = sphi 0, %s199
      %s216 = sphi 0, %s200
    $region4: #{experts_forward.1} parent=1 // loop_header_branch
      %26 = sbr.rel (%p24) target = $region8
    $region5: #{experts_forward.1} parent=1 // loop_body
      %s28 = ssub.s32 %s23, 1
      %s29 = ssub.s32 %s23, 2
      %s39 = sadd.s32 1, %s32
      %p40 = scmp.ge.s32.totalorder %s39, 2
      %s41 = scalar_select %p40, 0, %s39
      %s42 = sadd.s32 1, %s31
      %s43 = scalar_select %p40, %s42, %s31
      %p44 = scmp.ge.s32.totalorder %s43, 2
      %s45 = scalar_select %p44, 0, %s43
      %s46 = sadd.s32 1, %s30
      %s47 = scalar_select %p44, %s46, %s30
      %p48 = scmp.ge.s32.totalorder %s47, 2
      %s49 = scalar_select %p48, 0, %s47
      %s50 = smul.u32 %s30, 2
      %s51 = sadd.s32 %s50, %s31
      %s52 = smul.u32 %s49, 2
      %s53 = sadd.s32 %s52, %s45
      %s54 = ssub.s32 %s51, %s53
      %p55 = scmp.eq.s32.totalorder %s54, 0
      %s57 = sadd.s32 %s56, 1
      %s58 = scalar_select %p55, %s56, %s57
      %p61 = pneg %p55
      %p62 = scmp.eq.s32.totalorder %s23, 7
      %p63 = por %p61, %p62
      %p64 = scmp.ne.s32.totalorder %s56, %s59
      %p65 = scmp.eq.s32.totalorder %s23, 0
      %p66 = por %p64, %p65
      %p67 = scmp.ne.s32.totalorder %s56, %s59
      %p68 = scmp.eq.s32.totalorder %s28, 7
      %p69 = por %p67, %p68
      %p70 = scmp.ne.s32.totalorder %s59, %s60
      %p71 = scmp.eq.s32.totalorder %s28, 0
      %p72 = por %p70, %p71
      %p73 = scmp.ne.s32.totalorder %s59, %s60
      %p74 = scmp.eq.s32.totalorder %s29, 7
      %p75 = por %p73, %p74
      %p77 = scmp.ne.s32.totalorder %s60, %s76
      %p78 = scmp.eq.s32.totalorder %s29, 0
      %p79 = por %p77, %p78
      %s80 = ssub.s32 %s30, %s49
      %s81 = ssub.s32 %s32, %s41
      %s82 = sor.u32 %s80, %s81
      %p83 = scmp.eq.s32.totalorder %s82, 0
      %s85 = sadd.s32 %s84, 1
      %s86 = scalar_select %p83, %s84, %s85
      %p89 = pneg %p83
      %p90 = scmp.eq.s32.totalorder %s23, 7
      %p91 = por %p89, %p90
      %p92 = scmp.ne.s32.totalorder %s84, %s87
      %p93 = scmp.eq.s32.totalorder %s23, 0
      %p94 = por %p92, %p93
      %p95 = scmp.ne.s32.totalorder %s84, %s87
      %p96 = scmp.eq.s32.totalorder %s28, 7
      %p97 = por %p95, %p96
      %p98 = scmp.ne.s32.totalorder %s87, %s88
      %p99 = scmp.eq.s32.totalorder %s28, 0
      %p100 = por %p98, %p99
      %p101 = scmp.ne.s32.totalorder %s87, %s88
      %p102 = scmp.eq.s32.totalorder %s29, 7
      %p103 = por %p101, %p102
      %p105 = scmp.ne.s32.totalorder %s88, %s104
      %p106 = scmp.eq.s32.totalorder %s29, 0
      %p107 = por %p105, %p106
      %s108 = ssub.s32 %s30, %s49
      %s109 = ssub.s32 %s32, %s41
      %s110 = sor.u32 %s108, %s109
      %p111 = scmp.eq.s32.totalorder %s110, 0
      %s113 = sadd.s32 %s112, 1
      %s114 = scalar_select %p111, %s112, %s113
      %p117 = pneg %p111
      %p118 = scmp.eq.s32.totalorder %s23, 7
      %p119 = por %p117, %p118
      %p120 = scmp.ne.s32.totalorder %s112, %s115
      %p121 = scmp.eq.s32.totalorder %s23, 0
      %p122 = por %p120, %p121
      %p123 = scmp.ne.s32.totalorder %s112, %s115
      %p124 = scmp.eq.s32.totalorder %s28, 7
      %p125 = por %p123, %p124
      %p126 = scmp.ne.s32.totalorder %s115, %s116
      %p127 = scmp.eq.s32.totalorder %s28, 0
      %p128 = por %p126, %p127
      %p129 = scmp.ne.s32.totalorder %s115, %s116
      %p130 = scmp.eq.s32.totalorder %s29, 7
      %p131 = por %p129, %p130
      %p133 = scmp.ne.s32.totalorder %s116, %s132
      %p134 = scmp.eq.s32.totalorder %s29, 0
      %p135 = por %p133, %p134
      %s136 = ssub.s32 %s30, %s49
      %s137 = ssub.s32 %s32, %s41
      %s138 = sor.u32 %s136, %s137
      %p139 = scmp.eq.s32.totalorder %s138, 0
      %s141 = sadd.s32 %s140, 1
      %s142 = scalar_select %p139, %s140, %s141
      %p145 = pneg %p139
      %p146 = scmp.eq.s32.totalorder %s23, 7
      %p147 = por %p145, %p146
      %p148 = scmp.ne.s32.totalorder %s140, %s143
      %p149 = scmp.eq.s32.totalorder %s23, 0
      %p150 = por %p148, %p149
      %p151 = scmp.ne.s32.totalorder %s140, %s143
      %p152 = scmp.eq.s32.totalorder %s28, 7
      %p153 = por %p151, %p152
      %p154 = scmp.ne.s32.totalorder %s143, %s144
      %p155 = scmp.eq.s32.totalorder %s28, 0
      %p156 = por %p154, %p155
      %p157 = scmp.ne.s32.totalorder %s143, %s144
      %p158 = scmp.eq.s32.totalorder %s29, 7
      %p159 = por %p157, %p158
      %p161 = scmp.ne.s32.totalorder %s144, %s160
      %p162 = scmp.eq.s32.totalorder %s29, 0
      %p163 = por %p161, %p162
      %s164 = ssub.s32 %s30, %s49
      %p165 = scmp.eq.s32.totalorder %s164, 0
      %s167 = sadd.s32 %s166, 1
      %s168 = scalar_select %p165, %s166, %s167
      %p171 = pneg %p165
      %p172 = scmp.eq.s32.totalorder %s23, 7
      %p173 = por %p171, %p172
      %p174 = scmp.ne.s32.totalorder %s166, %s169
      %p175 = scmp.eq.s32.totalorder %s23, 0
      %p176 = por %p174, %p175
      %p177 = scmp.ne.s32.totalorder %s166, %s169
      %p178 = scmp.eq.s32.totalorder %s28, 7
      %p179 = por %p177, %p178
      %p180 = scmp.ne.s32.totalorder %s169, %s170
      %p181 = scmp.eq.s32.totalorder %s28, 0
      %p182 = por %p180, %p181
      %p183 = scmp.ne.s32.totalorder %s169, %s170
      %p184 = scmp.eq.s32.totalorder %s29, 7
      %p185 = por %p183, %p184
      %p187 = scmp.ne.s32.totalorder %s170, %s186
      %p188 = scmp.eq.s32.totalorder %s29, 0
      %p189 = por %p187, %p188
      %s190 = smul.u32 %s30, 2
      %s191 = sadd.s32 %s190, %s31
      %s192 = smul.u32 %s49, 2
      %s193 = sadd.s32 %s192, %s45
      %s194 = ssub.s32 %s191, %s193
      %p195 = scmp.eq.s32.totalorder %s194, 0
      %s197 = sadd.s32 %s196, 1
      %s198 = scalar_select %p195, %s196, %s197
      %p201 = pneg %p195
      %p202 = scmp.eq.s32.totalorder %s23, 7
      %p203 = por %p201, %p202
      %p204 = scmp.ne.s32.totalorder %s196, %s199
      %p205 = scmp.eq.s32.totalorder %s23, 0
      %p206 = por %p204, %p205
      %p207 = scmp.ne.s32.totalorder %s196, %s199
      %p208 = scmp.eq.s32.totalorder %s28, 7
      %p209 = por %p207, %p208
      %p210 = scmp.ne.s32.totalorder %s199, %s200
      %p211 = scmp.eq.s32.totalorder %s28, 0
      %p212 = por %p210, %p211
      %p213 = scmp.ne.s32.totalorder %s199, %s200
      %p214 = scmp.eq.s32.totalorder %s29, 7
      %p215 = por %p213, %p214
      %p217 = scmp.ne.s32.totalorder %s200, %s216
      %p218 = scmp.eq.s32.totalorder %s29, 0
      %p219 = por %p217, %p218
      %p220 = scmp.le.s32.totalorder 1, %s23
      %p221 = scmp.lt.s32.totalorder %s23, 9
      %p222 = pnand %p220, %p221
      %p223 = pneg %p222
      // Predicated region
      $region9: #{experts_forward.1} parent=5 // pred_check
        _
      $region10: #{experts_forward.1} parent=5 // pred_check_branch
        %225 = sbr.rel (%p222) target = $region12
      $region11: #{experts_forward.1} parent=5 // pred_region
        %s226 = ssub.s32 %s23, 1
      $region12: #{experts_forward.1} parent=5 // pred_fallthru
        _
      %p227 = scmp.lt.s32.totalorder %s23, 8
      // Predicated region
      $region13: #{experts_forward.1} parent=5 // pred_check
        %p228 = pneg %p227
      $region14: #{experts_forward.1} parent=5 // pred_check_branch
        %230 = sbr.rel (%p228) target = $region16
      $region15: #{experts_forward.1} parent=5 // pred_region
        // Predicated region
        $region17: #{experts_forward.1} parent=15 // pred_check
          %p231 = pneg %p66
        $region18: #{experts_forward.1} parent=15 // pred_check_branch
          %233 = sbr.rel (%p231) target = $region20
        $region19: #{experts_forward.1} parent=15 // pred_region
          #allocation14 [shape = 'u32[6]{0}', space=smem, size = 0x18, scoped, tag = 'DMA stride descriptor']
          %s234 = sand.u32 %s56, 1
          %s235 = scalar_lea.sflag [#allocation4], %s234
          %s236 = sand.u32 %s56, 1
          %s237 = smul.addr %s236, 16
          %s238 = scalar_lea.vmem [#allocation3], %s237
          %s239 = smul.u32 %s30, 2
          %s240 = sadd.s32 %s239, %s31
          %s241 = smul.u32 2, %s240
          %s243 = ssub.s32 256, 256
          %244 = vsyncadd %s235, %s243
          %s245 = smul.addr %s241, 64
          %s246 = scalar_lea.hbm %s0, %s245
          %s248 = sshll.u32 1, 14
          %s249 = sxor.u32 4294967295, %s248
          %s251 = sld [smem:[#allocation0]]
          %s252 = sadd.s32 2, %s251
          %s254 = sshll.u32 7, 26
          %s255 = sxor.u32 4294967295, %s254
          %s256 = sand.u32 0, %s255
          %s257 = sshll.u32 %s252, 26
          %s258 = sor.u32 %s256, %s257
          %s259 = sshll.u32 %s238, 4
          %s260 = int_to_ptr.vmem [resolvable:$true] %s259
          %266 = sst [smem:[#allocation14]] 512
          %s267 = scalar_lea.smem [#allocation14], 1
          %268 = sst [smem:[%s267]] 128
          %s269 = scalar_lea.smem [#allocation14], 2
          %270 = sst [smem:[%s269]] 2
          %s271 = scalar_lea.smem [#allocation14], 3
          %272 = sst [smem:[%s271]] 64
          %s273 = scalar_lea.smem [#allocation14], 4
          %274 = sst [smem:[%s273]] 64
          %s275 = scalar_lea.smem [#allocation14], 5
          %276 = sst [smem:[%s275]] 4
          %278 = dma.general %s246, 256, %s260, %s235, [#allocation13], [#allocation14], %s258, 0
        $region20: #{experts_forward.1} parent=15 // pred_fallthru
          _
        // Predicated region
        $region21: #{experts_forward.1} parent=15 // pred_check
          %p279 = pneg %p94
        $region22: #{experts_forward.1} parent=15 // pred_check_branch
          %281 = sbr.rel (%p279) target = $region24
        $region23: #{experts_forward.1} parent=15 // pred_region
          %s282 = sand.u32 %s23, 1
          %s283 = scalar_lea.sflag [#allocation7], %s282
          %s284 = sand.u32 %s84, 1
          %s285 = smul.addr %s284, 64
          %s286 = scalar_lea.vmem [#allocation6], %s285
          %s288 = ssub.s32 1024, 1024
          %289 = vsyncadd %s283, %s288
          %s290 = smul.addr %s30, 32
          %s291 = sadd.s32 %s32, %s290
          %s292 = smul.addr %s291, 64
          %s293 = scalar_lea.hbm %s1, %s292
          %s294 = sshll.u32 %s286, 4
          %s295 = int_to_ptr.vmem [resolvable:$true] %s294
          %300 = dma.hbm_to_vmem [thread:$0]  %s293, 1024, %s295, %s283, 128, 64, 4
        $region24: #{experts_forward.1} parent=15 // pred_fallthru
          _
        // Predicated region
        $region25: #{experts_forward.1} parent=15 // pred_check
          %p301 = pneg %p122
        $region26: #{experts_forward.1} parent=15 // pred_check_branch
          %303 = sbr.rel (%p301) target = $region28
        $region27: #{experts_forward.1} parent=15 // pred_region
          %s304 = sand.u32 %s23, 1
          %s305 = scalar_lea.sflag [#allocation7], %s304
          %s306 = sand.u32 %s112, 1
          %s307 = scalar_lea.vmem [#allocation8], %s306
          %s309 = ssub.s32 16, 16
          %310 = vsyncadd %s305, %s309
          %s311 = smul.addr %s30, 2
          %s312 = sadd.s32 %s32, %s311
          %s313 = smul.addr %s312, 16
          %s314 = scalar_lea.hbm %s2, %s313
          %s316 = sshll.u32 %s307, 4
          %s317 = int_to_ptr.vmem [resolvable:$true] %s316
          %319 = dma.hbm_to_vmem [thread:$0]  %s314, 16, %s317, %s305
        $region28: #{experts_forward.1} parent=15 // pred_fallthru
          _
        // Predicated region
        $region29: #{experts_forward.1} parent=15 // pred_check
          %p320 = pneg %p150
        $region30: #{experts_forward.1} parent=15 // pred_check_branch
          %322 = sbr.rel (%p320) target = $region32
        $region31: #{experts_forward.1} parent=15 // pred_region
          %s323 = sand.u32 %s23, 1
          %s324 = scalar_lea.sflag [#allocation10], %s323
          %s325 = sand.u32 %s140, 1
          %s326 = smul.addr %s325, 64
          %s327 = scalar_lea.vmem [#allocation9], %s326
          %s328 = smul.u32 16, %s32
          %s330 = ssub.s32 1024, 1024
          %331 = vsyncadd %s324, %s330
          %s332 = smul.addr %s30, 32
          %s333 = sadd.s32 %s328, %s332
          %s334 = smul.addr %s333, 64
          %s335 = scalar_lea.hbm %s3, %s334
          %s336 = sshll.u32 %s327, 4
          %s337 = int_to_ptr.vmem [resolvable:$true] %s336
          %342 = dma.hbm_to_vmem [thread:$0]  %s335, 1024, %s337, %s324, 64, 64, 4
        $region32: #{experts_forward.1} parent=15 // pred_fallthru
          _
        // Predicated region
        $region33: #{experts_forward.1} parent=15 // pred_check
          %p343 = pneg %p176
        $region34: #{experts_forward.1} parent=15 // pred_check_branch
          %345 = sbr.rel (%p343) target = $region36
        $region35: #{experts_forward.1} parent=15 // pred_region
          %s346 = sand.u32 %s23, 1
          %s347 = scalar_lea.sflag [#allocation10], %s346
          %s348 = sand.u32 %s166, 1
          %s349 = scalar_lea.vmem [#allocation11], %s348
          %s351 = ssub.s32 16, 16
          %352 = vsyncadd %s347, %s351
          %s353 = smul.addr %s30, 16
          %s354 = scalar_lea.hbm %s4, %s353
          %s356 = sshll.u32 %s349, 4
          %s357 = int_to_ptr.vmem [resolvable:$true] %s356
          %359 = dma.hbm_to_vmem [thread:$0]  %s354, 16, %s357, %s347
        $region36: #{experts_forward.1} parent=15 // pred_fallthru
          _
      $region16: #{experts_forward.1} parent=5 // pred_fallthru
        _
      %p360 = scmp.le.s32.totalorder 1, %s23
      %p361 = scmp.lt.s32.totalorder %s23, 9
      %p362 = pnand %p360, %p361
      %p363 = pneg %p362
      // Predicated region
      $region37: #{experts_forward.1} parent=5 // pred_check
        _
      $region38: #{experts_forward.1} parent=5 // pred_check_branch
        %365 = sbr.rel (%p362) target = $region40
      $region39: #{experts_forward.1} parent=5 // pred_region
        %s366 = ssub.s32 %s23, 1
        %s367 = sand.u32 %s59, 1
        %s368 = scalar_lea.sflag [#allocation4], %s367
        %s369 = sand.u32 %s59, 1
        %s370 = smul.addr %s369, 16
        %s371 = scalar_lea.vmem [#allocation3], %s370
        // Predicated region
        $region41: #{experts_forward.1} parent=39 // pred_check
          %p372 = pneg %p72
        $region42: #{experts_forward.1} parent=39 // pred_check_branch
          %374 = sbr.rel (%p372) target = $region44
        $region43: #{experts_forward.1} parent=39 // pred_region
          %375 = dma.done %s368, 256
        $region44: #{experts_forward.1} parent=39 // pred_fallthru
          _
        %s376 = sand.u32 %s28, 1
        %s377 = scalar_lea.sflag [#allocation7], %s376
        %s378 = sand.u32 %s87, 1
        %s379 = smul.addr %s378, 64
        %s380 = scalar_lea.vmem [#allocation6], %s379
        // Predicated region
        $region45: #{experts_forward.1} parent=39 // pred_check
          %p381 = pneg %p100
        $region46: #{experts_forward.1} parent=39 // pred_check_branch
          %383 = sbr.rel (%p381) target = $region48
        $region47: #{experts_forward.1} parent=39 // pred_region
          %384 = dma.done %s377, 1024
        $region48: #{experts_forward.1} parent=39 // pred_fallthru
          _
        %s385 = sand.u32 %s28, 1
        %s386 = scalar_lea.sflag [#allocation7], %s385
        %s387 = sand.u32 %s115, 1
        %s388 = scalar_lea.vmem [#allocation8], %s387
        // Predicated region
        $region49: #{experts_forward.1} parent=39 // pred_check
          %p389 = pneg %p128
        $region50: #{experts_forward.1} parent=39 // pred_check_branch
          %391 = sbr.rel (%p389) target = $region52
        $region51: #{experts_forward.1} parent=39 // pred_region
          %392 = dma.done %s386, 16
        $region52: #{experts_forward.1} parent=39 // pred_fallthru
          _
        %s393 = sand.u32 %s28, 1
        %s394 = scalar_lea.sflag [#allocation10], %s393
        %s395 = sand.u32 %s143, 1
        %s396 = smul.addr %s395, 64
        %s397 = scalar_lea.vmem [#allocation9], %s396
        // Predicated region
        $region53: #{experts_forward.1} parent=39 // pred_check
          %p398 = pneg %p156
        $region54: #{experts_forward.1} parent=39 // pred_check_branch
          %400 = sbr.rel (%p398) target = $region56
        $region55: #{experts_forward.1} parent=39 // pred_region
          %401 = dma.done %s394, 1024
        $region56: #{experts_forward.1} parent=39 // pred_fallthru
          _
        %s402 = sand.u32 %s28, 1
        %s403 = scalar_lea.sflag [#allocation10], %s402
        %s404 = sand.u32 %s169, 1
        %s405 = scalar_lea.vmem [#allocation11], %s404
        // Predicated region
        $region57: #{experts_forward.1} parent=39 // pred_check
          %p406 = pneg %p182
        $region58: #{experts_forward.1} parent=39 // pred_check_branch
          %408 = sbr.rel (%p406) target = $region60
        $region59: #{experts_forward.1} parent=39 // pred_region
          %409 = dma.done %s403, 16
        $region60: #{experts_forward.1} parent=39 // pred_fallthru
          _
        %s410 = sand.u32 %s59, 1
        %s411 = scalar_lea.sflag [#allocation4], %s410
        %s412 = sand.u32 %s59, 1
        %s413 = smul.addr %s412, 16
        %s414 = scalar_lea.vmem [#allocation3], %s413
        %p415 = pneg %p72
        %p416 = pneg %p69
        %s417 = sand.u32 %s28, 1
        %s418 = scalar_lea.sflag [#allocation7], %s417
        %s419 = sand.u32 %s87, 1
        %s420 = smul.addr %s419, 64
        %s421 = scalar_lea.vmem [#allocation6], %s420
        %p422 = pneg %p100
        %p423 = pneg %p97
        %s424 = sand.u32 %s28, 1
        %s425 = scalar_lea.sflag [#allocation7], %s424
        %s426 = sand.u32 %s115, 1
        %s427 = scalar_lea.vmem [#allocation8], %s426
        %p428 = pneg %p128
        %p429 = pneg %p125
        %s430 = sand.u32 %s28, 1
        %s431 = scalar_lea.sflag [#allocation10], %s430
        %s432 = sand.u32 %s143, 1
        %s433 = smul.addr %s432, 64
        %s434 = scalar_lea.vmem [#allocation9], %s433
        %p435 = pneg %p156
        %p436 = pneg %p153
        %s437 = sand.u32 %s28, 1
        %s438 = scalar_lea.sflag [#allocation10], %s437
        %s439 = sand.u32 %s169, 1
        %s440 = scalar_lea.vmem [#allocation11], %s439
        %p441 = pneg %p182
        %p442 = pneg %p179
        %p443 = pneg %p212
        %p444 = pneg %p209
        %s445 = sand.u32 %s199, 1
        %s446 = scalar_lea.sflag [#allocation5], %s445
        %s447 = sand.u32 %s199, 1
        %s448 = smul.addr %s447, 16
        %s449 = scalar_lea.vmem [#allocation12], %s448
        %s450 = smul.u32 %s33, 2
        %s451 = sadd.s32 %s450, %s34
        %s452 = smul.u32 2, %s451
        %s453 = smul.u32 16, %s35
        %s454 = smul.u32 %s33, 2
        %s455 = sadd.s32 %s454, %s34
        %s456 = smul.u32 2, %s455
        %v458 = vld [vmem:[%s371] sm:$0xf]
        %v459 = vld [vmem:[%s371 + $0x4] sm:$0xf]
        %v460 = vld [vmem:[%s371 + $0x8] sm:$0xf]
        %v461 = vld [vmem:[%s371 + $0xc] sm:$0xf]
        %p462 = scmp.eq.s32.totalorder %s35, 0
        // Predicated region
        $region61: #{experts_forward.1} parent=39 // pred_check
          %p463 = pneg %p462
        $region62: #{experts_forward.1} parent=39 // pred_check_branch
          %465 = sbr.rel (%p463) target = $region64
        $region63: #{experts_forward.1} parent=39 // pred_region
          %v466 = vld [vmem:[%s405] sm:$0x1]
          %v467 = vunpack.c.l.bf16 %v466
          %v468 = vlaneseq
          %v469 = vshrl.u32 %v468, 7
          %v470 = vsub.s32 0, %v469
          %v471 = vrot.slane %v467, %v470
          %472 = vst [vmem:[#allocation2] sm:$0xff] %v471
          %473 = vst [vmem:[#allocation2 + $0x8] sm:$0xff] %v471
          %474 = vst [vmem:[#allocation2 + $0x10] sm:$0xff] %v471
          %475 = vst [vmem:[#allocation2 + $0x18] sm:$0xff] %v471
        $region64: #{experts_forward.1} parent=39 // pred_fallthru
          _
        %v476 = vld [vmem:[%s380] sm:$0xf]
        %v477 = vld [vmem:[%s380 + $0x4] sm:$0xf]
        %v478 = vld [vmem:[%s380 + $0x8] sm:$0xf]
        %v479 = vld [vmem:[%s380 + $0xc] sm:$0xf]
        %v480 = vld [vmem:[%s380 + $0x10] sm:$0xf]
        %v481 = vld [vmem:[%s380 + $0x14] sm:$0xf]
        %v482 = vld [vmem:[%s380 + $0x18] sm:$0xf]
        %v483 = vld [vmem:[%s380 + $0x1c] sm:$0xf]
        %v484 = vld [vmem:[%s380 + $0x20] sm:$0xf]
        %v485 = vld [vmem:[%s380 + $0x24] sm:$0xf]
        %v486 = vld [vmem:[%s380 + $0x28] sm:$0xf]
        %v487 = vld [vmem:[%s380 + $0x2c] sm:$0xf]
        %v488 = vld [vmem:[%s380 + $0x30] sm:$0xf]
        %v489 = vld [vmem:[%s380 + $0x34] sm:$0xf]
        %v490 = vld [vmem:[%s380 + $0x38] sm:$0xf]
        %v491 = vld [vmem:[%s380 + $0x3c] sm:$0xf]
        %v492 = vld [vmem:[%s388] sm:$0x1]
        %v493 = vunpack.c.l.bf16 %v492
        %v494 = vlaneseq
        %v495 = vshrl.u32 %v494, 7
        %v496 = vsub.s32 0, %v495
        %v497 = vrot.slane %v493, %v496
        %v502 = vunpack.c.l.b16 %v458
        %v503 = vunpack.c.l.b16 %v459
        %v504 = vunpack.c.l.b16 %v460
        %v505 = vunpack.c.l.b16 %v461
        %v506 = vpack.c.b16 %v503, %v502
        %v507 = vpack.c.b16 %v505, %v504
        %v526 = vunpack.c.l.b16 %v476
        %v527 = vunpack.c.l.b16 %v477
        %v528 = vunpack.c.l.b16 %v478
        %v529 = vunpack.c.l.b16 %v479
        %v530 = vunpack.c.l.b16 %v480
        %v531 = vunpack.c.l.b16 %v481
        %v532 = vunpack.c.l.b16 %v482
        %v533 = vunpack.c.l.b16 %v483
        %v534 = vunpack.c.l.b16 %v484
        %v535 = vunpack.c.l.b16 %v485
        %v536 = vunpack.c.l.b16 %v486
        %v537 = vunpack.c.l.b16 %v487
        %v538 = vunpack.c.l.b16 %v488
        %v539 = vunpack.c.l.b16 %v489
        %v540 = vunpack.c.l.b16 %v490
        %v541 = vunpack.c.l.b16 %v491
        %v542 = vpack.c.b16 %v527, %v526
        %v543 = vpack.c.b16 %v529, %v528
        %v544 = vpack.c.b16 %v531, %v530
        %v545 = vpack.c.b16 %v533, %v532
        %v546 = vpack.c.b16 %v535, %v534
        %v547 = vpack.c.b16 %v537, %v536
        %v548 = vpack.c.b16 %v539, %v538
        %v549 = vpack.c.b16 %v541, %v540
        %558 = vmatprep.subr.bf16.mxu0 0
        %559 = vmatpush1.bf16.msra.mxu0 %v542
        %560 = vmatprep.subr.bf16.mxu0 0
        %561 = vmatpush1.bf16.msra.mxu0 %v543
        %562 = vmatprep.subr.bf16.mxu0 0
        %563 = vmatpush1.bf16.msra.mxu0 %v544
        %564 = vmatprep.subr.bf16.mxu0 0
        %565 = vmatpush1.bf16.msra.mxu0 %v545
        %566 = vmatprep.subr.bf16.mxu0 0
        %567 = vmatpush1.bf16.msra.mxu0 %v546
        %568 = vmatprep.subr.bf16.mxu0 0
        %569 = vmatpush1.bf16.msra.mxu0 %v547
        %570 = vmatprep.subr.bf16.mxu0 0
        %571 = vmatpush1.bf16.msra.mxu0 %v548
        %572 = vmatprep.subr.bf16.mxu0 0
        %573 = vmatpush1.bf16.msra.mxu0 %v549
        %574 = vmatprep.subr.bf16.mxu0 0
        %575 = vmatpush1.bf16.msra.mxu0 0
        %576 = vmatprep.subr.bf16.mxu0 0
        %577 = vmatpush1.bf16.msra.mxu0 0
        %578 = vmatprep.subr.bf16.mxu0 0
        %579 = vmatpush1.bf16.msra.mxu0 0
        %580 = vmatprep.subr.bf16.mxu0 0
        %581 = vmatpush1.bf16.msra.mxu0 0
        %582 = vmatprep.subr.bf16.mxu0 0
        %583 = vmatpush1.bf16.msra.mxu0 0
        %584 = vmatprep.subr.bf16.mxu0 0
        %585 = vmatpush1.bf16.msra.mxu0 0
        %586 = vmatprep.subr.bf16.mxu0 0
        %587 = vmatpush1.bf16.msra.mxu0 0
        %588 = vmatprep.subr.bf16.mxu0 0
        %589 = vmatpush1.bf16.msra.mxu0 0
        %590 = vmatprep.mubr.bf16.mxu0 0
        %591 = vmatmul.mubr.bf16.gmra.mrb[0].mxu0 %v506
        %v592 = vpop.f32.mrb[0].mxu0
        %v593 = vadd.f32 %v497, %v592
        %v594 = vpop.f32.mrb[0].mxu0
        %v595 = vpop.f32.mrb[0].mxu0
        %v596 = vadd.f32 %v497, %v595
        %v597 = vpop.f32.mrb[0].mxu0
        %598 = vmatprep.mubr.bf16.mxu0 0
        %599 = vmatmul.mubr.bf16.gmra.mrb[0].mxu0 %v507
        %v600 = vpop.f32.mrb[0].mxu0
        %v601 = vadd.f32 %v497, %v600
        %v602 = vpop.f32.mrb[0].mxu0
        %v603 = vpop.f32.mrb[0].mxu0
        %v604 = vadd.f32 %v497, %v603
        %v605 = vpop.f32.mrb[0].mxu0
        %606 = vdwg.mxu0
        %v607 = vmul.f32 %v593, %v593
        %v608 = vmul.f32 %v596, %v596
        %v609 = vmul.f32 %v601, %v601
        %v610 = vmul.f32 %v604, %v604
        %v611 = vmul.f32 %v593, %v607
        %v612 = vmul.f32 %v596, %v608
        %v613 = vmul.f32 %v601, %v609
        %v614 = vmul.f32 %v604, %v610
        %v615 = vmul.f32 %v611, 0.044715
        %v616 = vmul.f32 %v612, 0.044715
        %v617 = vmul.f32 %v613, 0.044715
        %v618 = vmul.f32 %v614, 0.044715
        %v619 = vadd.f32 %v593, %v615
        %v620 = vadd.f32 %v596, %v616
        %v621 = vadd.f32 %v601, %v617
        %v622 = vadd.f32 %v604, %v618
        %v623 = vmul.f32 %v619, 0.7978846
        %v624 = vmul.f32 %v620, 0.7978846
        %v625 = vmul.f32 %v621, 0.7978846
        %v626 = vmul.f32 %v622, 0.7978846
        %v627 = vtanh.pop %v623
        %v628 = vtanh.pop %v624
        %v629 = vtanh.pop %v625
        %v630 = vtanh.pop %v626
        %v631 = vadd.f32 %v627, 1.0
        %v632 = vadd.f32 %v628, 1.0
        %v633 = vadd.f32 %v629, 1.0
        %v634 = vadd.f32 %v630, 1.0
        %v635 = vmul.f32 %v631, 0.5
        %v636 = vmul.f32 %v632, 0.5
        %v637 = vmul.f32 %v633, 0.5
        %v638 = vmul.f32 %v634, 0.5
        %v639 = vmul.f32 %v593, %v635
        %v640 = vmul.f32 %v596, %v636
        %v641 = vmul.f32 %v601, %v637
        %v642 = vmul.f32 %v604, %v638
        %v643 = vld [vmem:[#allocation2] sm:$0xff]
        %v644 = vld [vmem:[#allocation2 + $0x8] sm:$0xff]
        %v645 = vld [vmem:[#allocation2 + $0x10] sm:$0xff]
        %v646 = vld [vmem:[#allocation2 + $0x18] sm:$0xff]
        %v647 = vpack.c.bf16 %v640, %v639
        %v648 = vpack.c.bf16 %v642, %v641
        %v649 = vld [vmem:[%s397] sm:$0xf]
        %v650 = vld [vmem:[%s397 + $0x4] sm:$0xf]
        %v651 = vld [vmem:[%s397 + $0x8] sm:$0xf]
        %v652 = vld [vmem:[%s397 + $0xc] sm:$0xf]
        %v653 = vld [vmem:[%s397 + $0x10] sm:$0xf]
        %v654 = vld [vmem:[%s397 + $0x14] sm:$0xf]
        %v655 = vld [vmem:[%s397 + $0x18] sm:$0xf]
        %v656 = vld [vmem:[%s397 + $0x1c] sm:$0xf]
        %v657 = vld [vmem:[%s397 + $0x20] sm:$0xf]
        %v658 = vld [vmem:[%s397 + $0x24] sm:$0xf]
        %v659 = vld [vmem:[%s397 + $0x28] sm:$0xf]
        %v660 = vld [vmem:[%s397 + $0x2c] sm:$0xf]
        %v661 = vld [vmem:[%s397 + $0x30] sm:$0xf]
        %v662 = vld [vmem:[%s397 + $0x34] sm:$0xf]
        %v663 = vld [vmem:[%s397 + $0x38] sm:$0xf]
        %v664 = vld [vmem:[%s397 + $0x3c] sm:$0xf]
        %v681 = vunpack.c.l.b16 %v649
        %v682 = vunpack.c.l.b16 %v650
        %v683 = vunpack.c.l.b16 %v651
        %v684 = vunpack.c.l.b16 %v652
        %v685 = vunpack.c.l.b16 %v653
        %v686 = vunpack.c.l.b16 %v654
        %v687 = vunpack.c.l.b16 %v655
        %v688 = vunpack.c.l.b16 %v656
        %v689 = vunpack.c.l.b16 %v657
        %v690 = vunpack.c.l.b16 %v658
        %v691 = vunpack.c.l.b16 %v659
        %v692 = vunpack.c.l.b16 %v660
        %v693 = vunpack.c.l.b16 %v661
        %v694 = vunpack.c.l.b16 %v662
        %v695 = vunpack.c.l.b16 %v663
        %v696 = vunpack.c.l.b16 %v664
        %v697 = vpack.c.b16 %v682, %v681
        %v698 = vpack.c.b16 %v684, %v683
        %v699 = vpack.c.b16 %v686, %v685
        %v700 = vpack.c.b16 %v688, %v687
        %v701 = vpack.c.b16 %v690, %v689
        %v702 = vpack.c.b16 %v692, %v691
        %v703 = vpack.c.b16 %v694, %v693
        %v704 = vpack.c.b16 %v696, %v695
        %713 = vmatprep.subr.bf16.mxu0 0
        %714 = vmatpush1.bf16.msra.mxu0 %v697
        %715 = vmatprep.subr.bf16.mxu0 0
        %716 = vmatpush1.bf16.msra.mxu0 %v698
        %717 = vmatprep.subr.bf16.mxu0 0
        %718 = vmatpush1.bf16.msra.mxu0 %v699
        %719 = vmatprep.subr.bf16.mxu0 0
        %720 = vmatpush1.bf16.msra.mxu0 %v700
        %721 = vmatprep.subr.bf16.mxu0 0
        %722 = vmatpush1.bf16.msra.mxu0 %v701
        %723 = vmatprep.subr.bf16.mxu0 0
        %724 = vmatpush1.bf16.msra.mxu0 %v702
        %725 = vmatprep.subr.bf16.mxu0 0
        %726 = vmatpush1.bf16.msra.mxu0 %v703
        %727 = vmatprep.subr.bf16.mxu0 0
        %728 = vmatpush1.bf16.msra.mxu0 %v704
        %729 = vmatprep.subr.bf16.mxu0 0
        %730 = vmatpush1.bf16.msra.mxu0 0
        %731 = vmatprep.subr.bf16.mxu0 0
        %732 = vmatpush1.bf16.msra.mxu0 0
        %733 = vmatprep.subr.bf16.mxu0 0
        %734 = vmatpush1.bf16.msra.mxu0 0
        %735 = vmatprep.subr.bf16.mxu0 0
        %736 = vmatpush1.bf16.msra.mxu0 0
        %737 = vmatprep.subr.bf16.mxu0 0
        %738 = vmatpush1.bf16.msra.mxu0 0
        %739 = vmatprep.subr.bf16.mxu0 0
        %740 = vmatpush1.bf16.msra.mxu0 0
        %741 = vmatprep.subr.bf16.mxu0 0
        %742 = vmatpush1.bf16.msra.mxu0 0
        %743 = vmatprep.subr.bf16.mxu0 0
        %744 = vmatpush1.bf16.msra.mxu0 0
        %745 = vmatprep.mubr.bf16.mxu0 0
        %746 = vmatmul.mubr.bf16.gmra.mrb[0].mxu0 %v647
        %v747 = vpop.f32.mrb[0].mxu0
        %v748 = vadd.f32 0.0, %v747
        %v749 = vpop.f32.mrb[0].mxu0
        %v750 = vpop.f32.mrb[0].mxu0
        %v751 = vadd.f32 0.0, %v750
        %v752 = vpop.f32.mrb[0].mxu0
        %753 = vmatprep.mubr.bf16.mxu0 0
        %754 = vmatmul.mubr.bf16.gmra.mrb[0].mxu0 %v648
        %v755 = vpop.f32.mrb[0].mxu0
        %v756 = vadd.f32 0.0, %v755
        %v757 = vpop.f32.mrb[0].mxu0
        %v758 = vpop.f32.mrb[0].mxu0
        %v759 = vadd.f32 0.0, %v758
        %v760 = vpop.f32.mrb[0].mxu0
        %761 = vdwg.mxu0
        %v762 = vadd.f32 %v643, %v748
        %v763 = vadd.f32 %v644, %v751
        %v764 = vadd.f32 %v645, %v756
        %v765 = vadd.f32 %v646, %v759
        %766 = vst [vmem:[#allocation2] sm:$0xff] %v762
        %767 = vst [vmem:[#allocation2 + $0x8] sm:$0xff] %v763
        %768 = vst [vmem:[#allocation2 + $0x10] sm:$0xff] %v764
        %769 = vst [vmem:[#allocation2 + $0x18] sm:$0xff] %v765
        %p770 = scmp.eq.s32.totalorder %s35, 1
        // Predicated region
        $region65: #{experts_forward.1} parent=39 // pred_check
          %p771 = pneg %p770
        $region66: #{experts_forward.1} parent=39 // pred_check_branch
          %773 = sbr.rel (%p771) target = $region68
        $region67: #{experts_forward.1} parent=39 // pred_region
          %v774 = vld [vmem:[#allocation2] sm:$0xff]
          %v775 = vld [vmem:[#allocation2 + $0x8] sm:$0xff]
          %v776 = vld [vmem:[#allocation2 + $0x10] sm:$0xff]
          %v777 = vld [vmem:[#allocation2 + $0x18] sm:$0xff]
          %v778 = vpack.c.bf16 %v775, %v774
          %v779 = vpack.c.bf16 %v777, %v776
          %v782 = vunpack.c.l.b16 %v778
          %v783 = vunpack.c.h.b16 %v778
          %v784 = vunpack.c.l.b16 %v779
          %v785 = vunpack.c.h.b16 %v779
          %v786 = vpack.c.b16 %v782, %v782
          %v787 = vpack.c.b16 %v783, %v783
          %v788 = vpack.c.b16 %v784, %v784
          %v789 = vpack.c.b16 %v785, %v785
          %794 = vst [vmem:[%s449] sm:$0xf] %v786
          %795 = vst [vmem:[%s449 + $0x4] sm:$0xf] %v787
          %796 = vst [vmem:[%s449 + $0x8] sm:$0xf] %v788
          %797 = vst [vmem:[%s449 + $0xc] sm:$0xf] %v789
        $region68: #{experts_forward.1} parent=39 // pred_fallthru
          _
        %s798 = sand.u32 %s199, 1
        %s799 = scalar_lea.sflag [#allocation5], %s798
        %s800 = sand.u32 %s199, 1
        %s801 = smul.addr %s800, 16
        %s802 = scalar_lea.vmem [#allocation12], %s801
        // Predicated region
        $region69: #{experts_forward.1} parent=39 // pred_check
          %p803 = pneg %p209
        $region70: #{experts_forward.1} parent=39 // pred_check_branch
          %805 = sbr.rel (%p803) target = $region72
        $region71: #{experts_forward.1} parent=39 // pred_region
          #allocation16 [shape = 'u32[6]{0}', space=smem, size = 0x18, scoped, tag = 'DMA stride descriptor']
          %s806 = smul.u32 %s33, 2
          %s807 = sadd.s32 %s806, %s34
          %s808 = smul.u32 2, %s807
          %s810 = ssub.s32 256, 256
          %811 = vsyncadd %s799, %s810
          %s812 = smul.addr %s808, 64
          %s813 = scalar_lea.hbm %s5, %s812
          %s815 = sshll.u32 1, 14
          %s816 = sxor.u32 4294967295, %s815
          %s819 = sshll.u32 7, 18
          %s820 = sxor.u32 4294967295, %s819
          %s821 = sand.u32 0, %s820
          %s823 = sor.u32 %s821, 0
          %s825 = sshll.u32 3, 24
          %s826 = sxor.u32 4294967295, %s825
          %s827 = sand.u32 %s823, %s826
          %s829 = sor.u32 %s827, 0
          %s830 = sshll.u32 %s802, 4
          %s831 = int_to_ptr.vmem [resolvable:$true] %s830
          %837 = sst [smem:[#allocation16]] 128
          %s838 = scalar_lea.smem [#allocation16], 1
          %839 = sst [smem:[%s838]] 512
          %s840 = scalar_lea.smem [#allocation16], 2
          %841 = sst [smem:[%s840]] 2
          %s842 = scalar_lea.smem [#allocation16], 3
          %843 = sst [smem:[%s842]] 64
          %s844 = scalar_lea.smem [#allocation16], 4
          %845 = sst [smem:[%s844]] 64
          %s846 = scalar_lea.smem [#allocation16], 5
          %847 = sst [smem:[%s846]] 4
          %849 = dma.general %s831, 256, %s813, %s799, [#allocation15], [#allocation16], %s829, 0
        $region72: #{experts_forward.1} parent=39 // pred_fallthru
          _
      $region40: #{experts_forward.1} parent=5 // pred_fallthru
        _
      %p850 = scmp.le.s32.totalorder 2, %s23
      // Predicated region
      $region73: #{experts_forward.1} parent=5 // pred_check
        %p851 = pneg %p850
      $region74: #{experts_forward.1} parent=5 // pred_check_branch
        %853 = sbr.rel (%p851) target = $region76
      $region75: #{experts_forward.1} parent=5 // pred_region
        %s854 = ssub.s32 %s23, 2
        // Predicated region
        $region77: #{experts_forward.1} parent=75 // pred_check
          %p855 = pneg %p215
        $region78: #{experts_forward.1} parent=75 // pred_check_branch
          %857 = sbr.rel (%p855) target = $region80
        $region79: #{experts_forward.1} parent=75 // pred_region
          %s858 = sand.u32 %s200, 1
          %s859 = scalar_lea.sflag [#allocation5], %s858
          %s860 = sand.u32 %s200, 1
          %s861 = smul.addr %s860, 16
          %s862 = scalar_lea.vmem [#allocation12], %s861
          %863 = dma.done %s859, 256
        $region80: #{experts_forward.1} parent=75 // pred_fallthru
          _
      $region76: #{experts_forward.1} parent=5 // pred_fallthru
        _
    $region6: #{experts_forward.1} parent=1 // loop_footer
      %s27 = sadd.s32 1, %s23
    $region7: #{experts_forward.1} parent=1 // loop_footer_branch
      %22 = sbr.rel target = $region3
    $region8: #{experts_forward.1} parent=1 // loop_exit
      _
    %864 = vsyncpa [#allocation4], 1
    %s865 = scalar_lea.sflag [#allocation4], 1
    %866 = vsyncpa %s865, 1
    %867 = vsyncpa [#allocation7], 1
    %s868 = scalar_lea.sflag [#allocation7], 1
    %869 = vsyncpa %s868, 1
    %870 = vsyncpa [#allocation10], 1
    %s871 = scalar_lea.sflag [#allocation10], 1
    %872 = vsyncpa %s871, 1
    %873 = vsyncpa [#allocation5], 1
    %s874 = scalar_lea.sflag [#allocation5], 1
    %875 = vsyncpa %s874, 1

</llo_original>
